<compile_context>
chip_gen: v5e
topology: v5e:2x2
jax: 0.10.0
libtpu: 0.0.40
codegen_flags: <defaults>
</compile_context>

<pallas_src>
import functools

import jax
import jax.numpy as jnp
from jax.experimental import pallas as pl
from jax.experimental.pallas import tpu as pltpu  # noqa: F401  (TPU backend)


# ---------------------------------------------------------------------------
# Fused Pallas kernel
# ---------------------------------------------------------------------------
def _fused_kernel(*refs, hourly_cfg, daily_cfg):
    """Fully fused ConvNetplus forward.

    ref order (inputs, then the single output):
      xh_ref  (Cin_h, BT_h + 2*H0_h)  hourly input, flat (C, B*T) + zero halo
      xd_ref  (Cin_d, BT_d + 2*H0_d)  daily  input, flat (C, B*T) + zero halo
      per hourly layer: w2d (Cout, K*Cin), scale (Cout,1), shift (Cout,1),
                        tap_mask (K, Wout)
      per daily  layer: same 4 refs
      wdin (1, Cd)      daily Linear weight pre-divided by T_d (mean folded)
      bd   (1, 1)       daily Linear bias
      segM (BT_d, BT_h) per-batch segment-sum + broadcast-to-hourly matrix
      pmask (1, BT_h)   prediction-hour mask (6 <= t < 21)
      o_ref (1, BT_h)   output
    """
    o_ref = refs[-1]
    it = iter(refs[:-1])

    xh_ref = next(it)
    xd_ref = next(it)

    def conv_branch(a, cfgs):
        # a: (Cin, Win) value.  Each layer: masked im2col -> one MXU dot ->
        # folded-BN affine -> activation.  Width shrinks by (K-1) per layer.
        for (K, act) in cfgs:
            w_ref, s_ref, b_ref, m_ref = next(it), next(it), next(it), next(it)
            Win = a.shape[1]
            Wout = Win - (K - 1)
            blocks = []
            for k in range(K):                      # K static lane slices
                blocks.append(a[:, k:k + Wout] * m_ref[k:k + 1, :])
            im = jnp.concatenate(blocks, axis=0)    # (K*Cin, Wout)
            y = jnp.dot(w_ref[...], im,
                        preferred_element_type=jnp.float32)   # (Cout, Wout)
            y = y * s_ref[...] + b_ref[...]         # folded BN (+ conv bias)
            if act == "relu":
                y = jnp.maximum(y, 0.0)
            elif act == "sigmoid":
                y = jax.nn.sigmoid(y)
            a = y
        return a

    out_h = conv_branch(xh_ref[...], hourly_cfg)    # (1, BT_h)
    d_act = conv_branch(xd_ref[...], daily_cfg)     # (Cd, BT_d)

    wdin_ref, bd_ref, segm_ref, pmask_ref = next(it), next(it), next(it), next(it)
    # mean-over-time + Linear + per-batch broadcast as two small dots.
    row = jnp.dot(wdin_ref[...], d_act,
                  preferred_element_type=jnp.float32)          # (1, BT_d)
    out_d = jax.nn.sigmoid(
        jnp.dot(row, segm_ref[...], preferred_element_type=jnp.float32)
        + bd_ref[...])                                         # (1, BT_h)

    o_ref[...] = (5.0 * out_h * out_d * pmask_ref[...]).astype(o_ref.dtype)


# ---------------------------------------------------------------------------
# Wrapper-side precomputation
# ---------------------------------------------------------------------------
def _branch_tables(Ks, T, B):
    """Per-layer tap-mask tables for a conv branch stored in flat+halo form.

    Returns (H0, [mask_layer0, mask_layer1, ...]) where mask_l has shape
    (K_l, Wout_l); mask[k, j] = 1 iff output lane j is a valid flat position
    m = j - H_out and the tap offset d = k - pad stays inside the SAME batch
    segment (0 <= t(m)+d < T).  This realizes both the 'same' zero padding and
    batch isolation, so the conv is a single masked-im2col matmul.
    """
    pads = [(k - 1) // 2 for k in Ks]
    H0 = sum(pads)
    H = H0
    Win = B * T + 2 * H0
    tables = []
    for K, P in zip(Ks, pads):
        Wout = Win - (K - 1)
        H_out = H - P
        j = jnp.arange(Wout)
        m = j - H_out
        valid = (m >= 0) & (m < B * T)
        t = jnp.where(valid, m % T, -10_000)
        rows = [((t + (k - P) >= 0) & (t + (k - P) < T)).astype(jnp.float32)
                for k in range(K)]
        tables.append(jnp.stack(rows, axis=0))      # (K, Wout)
        Win, H = Wout, H_out
    return H0, tables


def _flat_pad(X, H0):
    """(B, C, T) -> (C, B*T) lane-dense slab with H0 zero lanes on each side."""
    C = X.shape[1]
    Xf = jnp.transpose(X, (1, 0, 2)).reshape(C, -1).astype(jnp.float32)
    return jnp.pad(Xf, ((0, 0), (H0, H0)))


# ---------------------------------------------------------------------------
# Parameters (deterministic, synthetic)
# ---------------------------------------------------------------------------
def init_params(key, nb_in, ch_h, nl_h, ch_d, nl_d):
    keys = iter(jax.random.split(key, 128))

    def conv_block(cin, cout, K):
        return dict(
            w=0.1 * jax.random.normal(next(keys), (cout, cin, K), jnp.float32),
            b=0.1 * jax.random.normal(next(keys), (cout,), jnp.float32),
            gamma=1.0 + 0.1 * jax.random.normal(next(keys), (cout,), jnp.float32),
            beta=0.1 * jax.random.normal(next(keys), (cout,), jnp.float32),
            mean=0.1 * jax.random.normal(next(keys), (cout,), jnp.float32),
            var=1.0 + 0.1 * jnp.abs(jax.random.normal(next(keys), (cout,), jnp.float32)),
        )

    raw = dict(hourly=[], daily=[])
    for n in range(nl_h):
        raw["hourly"].append(conv_block(nb_in if n == 0 else ch_h, ch_h, 5))
    for n in range(nl_d):
        raw["daily"].append(conv_block(nb_in if n == 0 else ch_d, ch_d, 5))
    raw["last_h_w"] = 0.1 * jax.random.normal(next(keys), (1, ch_h, 3), jnp.float32)
    raw["last_h_b"] = 0.1 * jax.random.normal(next(keys), (1,), jnp.float32)
    raw["lin_d_w"] = 0.1 * jax.random.normal(next(keys), (ch_d,), jnp.float32)
    raw["lin_d_b"] = 0.1 * jax.random.normal(next(keys), (1,), jnp.float32)
    return raw


def fold_params(raw, eps=1e-5):
    def fold(blk):
        s = blk["gamma"] / jnp.sqrt(blk["var"] + eps)
        b = blk["beta"] + (blk["b"] - blk["mean"]) * s
        return (blk["w"], s, b)

    return dict(
        hourly=[fold(b) for b in raw["hourly"]],
        daily=[fold(b) for b in raw["daily"]],
        last_h=(raw["last_h_w"], raw["last_h_b"]),
        lin_d=(raw["lin_d_w"], raw["lin_d_b"]),
    )


# ---------------------------------------------------------------------------
# Forward pass (input assembly in JAX, everything else in one Pallas kernel)
# ---------------------------------------------------------------------------
def _assemble_inputs(yr, doy, era5_main, era5_hourly, era5_daily):
    B = yr.shape[0]
    doy_h = jnp.tile(doy, (1, 24))[:, None, :]
    yr_h = jnp.tile(yr, (1, 24))[:, None, :]
    e5h = jnp.transpose(era5_hourly, (0, 1, 3, 2)).reshape(
        B, -1, era5_hourly.shape[2])                     # b (f x) t
    e5m = jnp.squeeze(era5_main, axis=-1)                # fixed: only last dim
    X_h = jnp.concatenate([e5m, e5h, doy_h, yr_h], axis=1)

    doy_d = jnp.tile(doy, (1, 7))[:, None, :]
    yr_d = jnp.tile(yr, (1, 7))[:, None, :]
    e5d = jnp.transpose(era5_daily, (0, 1, 3, 2)).reshape(
        B, -1, era5_daily.shape[2])                      # b (f x) t
    X_d = jnp.concatenate([e5d, doy_d, yr_d], axis=1)
    return X_h, X_d


def _pred_mask_row(BT_h, T_h):
    t = jnp.arange(BT_h) % T_h
    return ((t >= 6) & (t < 21)).astype(jnp.float32)[None, :]   # (1, BT_h)


def convnetplus_forward(params, yr, doy, era5_main, era5_hourly, era5_daily):
    B = yr.shape[0]
    T_h, T_d = 24, 7
    BT_h, BT_d = B * T_h, B * T_d
    X_h, X_d = _assemble_inputs(yr, doy, era5_main, era5_hourly, era5_daily)

    # layer lists: (w, scale, shift, act)
    h_layers = [(w, s, b, "relu") for (w, s, b) in params["hourly"]]
    wl, bl = params["last_h"]
    h_layers.append((wl, jnp.ones((1,), jnp.float32), bl, "sigmoid"))
    d_layers = [(w, s, b, "relu") for (w, s, b) in params["daily"]]

    Ks_h = [w.shape[2] for (w, _, _, _) in h_layers]
    Ks_d = [w.shape[2] for (w, _, _, _) in d_layers]
    H0_h, masks_h = _branch_tables(Ks_h, T_h, B)
    H0_d, masks_d = _branch_tables(Ks_d, T_d, B)

    inputs = [_flat_pad(X_h, H0_h), _flat_pad(X_d, H0_d)]

    flops = 0
    h_cfg, d_cfg = [], []
    for (w, s, b, act), mask in zip(h_layers, masks_h):
        Cout, Cin, K = w.shape
        inputs += [jnp.transpose(w, (0, 2, 1)).reshape(Cout, K * Cin).astype(jnp.float32),
                   s.reshape(Cout, 1).astype(jnp.float32),
                   b.reshape(Cout, 1).astype(jnp.float32),
                   mask]
        h_cfg.append((K, act))
        flops += 2 * Cout * K * Cin * int(mask.shape[1])
    for (w, s, b, act), mask in zip(d_layers, masks_d):
        Cout, Cin, K = w.shape
        inputs += [jnp.transpose(w, (0, 2, 1)).reshape(Cout, K * Cin).astype(jnp.float32),
                   s.reshape(Cout, 1).astype(jnp.float32),
                   b.reshape(Cout, 1).astype(jnp.float32),
                   mask]
        d_cfg.append((K, act))
        flops += 2 * Cout * K * Cin * int(mask.shape[1])

    wd, bd = params["lin_d"]
    Cd = wd.shape[0]
    wdin = (wd / T_d).reshape(1, Cd).astype(jnp.float32)          # mean folded in
    bd2 = bd.reshape(1, 1).astype(jnp.float32)
    segM = (jnp.arange(BT_d)[:, None] // T_d
            == jnp.arange(BT_h)[None, :] // T_h).astype(jnp.float32)   # (BT_d, BT_h)
    pmask = _pred_mask_row(BT_h, T_h)
    inputs += [wdin, bd2, segM, pmask]
    flops += 2 * Cd * BT_d + 2 * BT_d * BT_h + 4 * BT_h

    kern = functools.partial(_fused_kernel,
                             hourly_cfg=tuple(h_cfg), daily_cfg=tuple(d_cfg))
    bytes_accessed = int(sum(x.size for x in inputs) * 4 + BT_h * 4)
    out_row = pl.pallas_call(
        kern,
        out_shape=jax.ShapeDtypeStruct((1, BT_h), jnp.float32),
        cost_estimate=pl.CostEstimate(flops=int(flops),
                                      transcendentals=int(2 * BT_h),
                                      bytes_accessed=bytes_accessed),
    )(*inputs)

    return out_row.reshape(B, T_h)[:, None, :]                    # (B, 1, 24)


# ---------------------------------------------------------------------------
# Pure-JAX reference (for correctness check only)
# ---------------------------------------------------------------------------
def _ref_conv1d(x, w, bias, pad):
    B, Cin, T = x.shape
    Cout, _, K = w.shape
    xp = jnp.pad(x, ((0, 0), (0, 0), (pad, pad)))
    out = jnp.zeros((B, Cout, T), jnp.float32)
    for k in range(K):
        out = out + jnp.einsum("oi,bit->bot", w[:, :, k], xp[:, :, k:k + T])
    return out + bias[None, :, None]


def ref_forward(raw, yr, doy, era5_main, era5_hourly, era5_daily, eps=1e-5):
    X_h, X_d = _assemble_inputs(yr, doy, era5_main, era5_hourly, era5_daily)

    def block(x, blk):
        y = _ref_conv1d(x, blk["w"], blk["b"], (blk["w"].shape[2] - 1) // 2)
        y = (y - blk["mean"][None, :, None]) / jnp.sqrt(blk["var"][None, :, None] + eps)
        y = y * blk["gamma"][None, :, None] + blk["beta"][None, :, None]
        return jnp.maximum(y, 0.0)

    h = X_h
    for blk in raw["hourly"]:
        h = block(h, blk)
    out_h = jax.nn.sigmoid(_ref_conv1d(h, raw["last_h_w"], raw["last_h_b"], 1))  # (B,1,24)

    d = X_d
    for blk in raw["daily"]:
        d = block(d, blk)
    md = jnp.mean(d, axis=2)                                                     # (B,Cd)
    out_d = jax.nn.sigmoid(md @ raw["lin_d_w"][:, None] + raw["lin_d_b"])        # (B,1)

    t = jnp.arange(24)
    pmask = ((t >= 6) & (t < 21)).astype(jnp.float32)[None, None, :]
    return 5.0 * out_h * out_d[:, :, None] * pmask                               # (B,1,24)


# ---------------------------------------------------------------------------
if __name__ == "__main__":
    key = jax.random.PRNGKey(0)
    k_yr, k_doy, k_m, k_h, k_d, k_p = jax.random.split(key, 6)

    B = 2
    # channels: era5_main 2 + hourly (2 feat x 2 loc)=4 + doy + yr = 8
    #           era5_daily (3 feat x 2 loc)=6 + doy + yr = 8  -> nb_input_features=8
    yr = jax.random.normal(k_yr, (B, 1), jnp.float32)
    doy = jax.random.normal(k_doy, (B, 1), jnp.float32)
    era5_main = jax.random.normal(k_m, (B, 2, 24, 1), jnp.float32)
    era5_hourly = jax.random.normal(k_h, (B, 2, 24, 2), jnp.float32)
    era5_daily = jax.random.normal(k_d, (B, 3, 7, 2), jnp.float32)

    nb_input_features = 8
    nb_hidden_hourly, nb_layer_hourly = 16, 2
    nb_hidden_daily, nb_layer_daily = 16, 2

    raw = init_params(k_p, nb_input_features,
                      nb_hidden_hourly, nb_layer_hourly,
                      nb_hidden_daily, nb_layer_daily)
    params = fold_params(raw)

    out = convnetplus_forward(params, yr, doy, era5_main, era5_hourly, era5_daily)
    out = jax.block_until_ready(out)

    ref = ref_forward(raw, yr, doy, era5_main, era5_hourly, era5_daily)
    assert out.shape == (B, 1, 24), out.shape
    assert jnp.allclose(out, ref, atol=1e-4, rtol=1e-4), float(jnp.max(jnp.abs(out - ref)))
    print("KERNEL_OK")
</pallas_src>

<mosaic_0001>
module attributes {stable_mosaic.version = 11 : i64} {
  func.func @_fused_kernel(%arg0: memref<8x58xf32, #tpu.memory_space<vmem>>, %arg1: memref<8x22xf32, #tpu.memory_space<vmem>>, %arg2: memref<16x40xf32, #tpu.memory_space<vmem>>, %arg3: memref<16x1xf32, #tpu.memory_space<vmem>>, %arg4: memref<16x1xf32, #tpu.memory_space<vmem>>, %arg5: memref<5x54xf32, #tpu.memory_space<vmem>>, %arg6: memref<16x80xf32, #tpu.memory_space<vmem>>, %arg7: memref<16x1xf32, #tpu.memory_space<vmem>>, %arg8: memref<16x1xf32, #tpu.memory_space<vmem>>, %arg9: memref<5x50xf32, #tpu.memory_space<vmem>>, %arg10: memref<1x48xf32, #tpu.memory_space<vmem>>, %arg11: memref<1x1xf32, #tpu.memory_space<vmem>>, %arg12: memref<1x1xf32, #tpu.memory_space<vmem>>, %arg13: memref<3x48xf32, #tpu.memory_space<vmem>>, %arg14: memref<16x40xf32, #tpu.memory_space<vmem>>, %arg15: memref<16x1xf32, #tpu.memory_space<vmem>>, %arg16: memref<16x1xf32, #tpu.memory_space<vmem>>, %arg17: memref<5x18xf32, #tpu.memory_space<vmem>>, %arg18: memref<16x80xf32, #tpu.memory_space<vmem>>, %arg19: memref<16x1xf32, #tpu.memory_space<vmem>>, %arg20: memref<16x1xf32, #tpu.memory_space<vmem>>, %arg21: memref<5x14xf32, #tpu.memory_space<vmem>>, %arg22: memref<1x16xf32, #tpu.memory_space<vmem>>, %arg23: memref<1x1xf32, #tpu.memory_space<vmem>>, %arg24: memref<14x48xf32, #tpu.memory_space<vmem>>, %arg25: memref<1x48xf32, #tpu.memory_space<vmem>>, %arg26: memref<1x48xf32, #tpu.memory_space<vmem>>) attributes {dimension_semantics = [], scalar_prefetch = 0 : i64, scratch_operands = 0 : i64, tpu.core_type = #tpu.core_type<tc>} {
    %c0 = arith.constant 0 : index
    %c0_0 = arith.constant 0 : index
    %0 = vector.load %arg0[%c0, %c0_0] : memref<8x58xf32, #tpu.memory_space<vmem>>, vector<8x58xf32>
    %1 = vector.extract_strided_slice %0 {offsets = [0, 0], sizes = [8, 54], strides = [1, 1]} : vector<8x58xf32> to vector<8x54xf32>
    %c0_1 = arith.constant 0 : index
    %c0_2 = arith.constant 0 : index
    %2 = vector.load %arg5[%c0_1, %c0_2] : memref<5x54xf32, #tpu.memory_space<vmem>>, vector<1x54xf32>
    %3 = vector.broadcast %2 : vector<1x54xf32> to vector<8x54xf32>
    %4 = arith.mulf %1, %3 : vector<8x54xf32>
    %5 = vector.extract_strided_slice %0 {offsets = [0, 1], sizes = [8, 54], strides = [1, 1]} : vector<8x58xf32> to vector<8x54xf32>
    %c1 = arith.constant 1 : index
    %c0_3 = arith.constant 0 : index
    %6 = vector.load %arg5[%c1, %c0_3] : memref<5x54xf32, #tpu.memory_space<vmem>>, vector<1x54xf32>
    %7 = vector.broadcast %6 : vector<1x54xf32> to vector<8x54xf32>
    %8 = arith.mulf %5, %7 : vector<8x54xf32>
    %9 = vector.extract_strided_slice %0 {offsets = [0, 2], sizes = [8, 54], strides = [1, 1]} : vector<8x58xf32> to vector<8x54xf32>
    %c2 = arith.constant 2 : index
    %c0_4 = arith.constant 0 : index
    %10 = vector.load %arg5[%c2, %c0_4] : memref<5x54xf32, #tpu.memory_space<vmem>>, vector<1x54xf32>
    %11 = vector.broadcast %10 : vector<1x54xf32> to vector<8x54xf32>
    %12 = arith.mulf %9, %11 : vector<8x54xf32>
    %13 = vector.extract_strided_slice %0 {offsets = [0, 3], sizes = [8, 54], strides = [1, 1]} : vector<8x58xf32> to vector<8x54xf32>
    %c3 = arith.constant 3 : index
    %c0_5 = arith.constant 0 : index
    %14 = vector.load %arg5[%c3, %c0_5] : memref<5x54xf32, #tpu.memory_space<vmem>>, vector<1x54xf32>
    %15 = vector.broadcast %14 : vector<1x54xf32> to vector<8x54xf32>
    %16 = arith.mulf %13, %15 : vector<8x54xf32>
    %17 = vector.extract_strided_slice %0 {offsets = [0, 4], sizes = [8, 54], strides = [1, 1]} : vector<8x58xf32> to vector<8x54xf32>
    %c4 = arith.constant 4 : index
    %c0_6 = arith.constant 0 : index
    %18 = vector.load %arg5[%c4, %c0_6] : memref<5x54xf32, #tpu.memory_space<vmem>>, vector<1x54xf32>
    %19 = vector.broadcast %18 : vector<1x54xf32> to vector<8x54xf32>
    %20 = arith.mulf %17, %19 : vector<8x54xf32>
    %21 = tpu.concatenate %4, %8, %12, %16, %20 in 0 : vector<8x54xf32>, vector<8x54xf32>, vector<8x54xf32>, vector<8x54xf32>, vector<8x54xf32> -> vector<40x54xf32>
    %c0_7 = arith.constant 0 : index
    %c0_8 = arith.constant 0 : index
    %22 = vector.load %arg2[%c0_7, %c0_8] : memref<16x40xf32, #tpu.memory_space<vmem>>, vector<16x40xf32>
    %cst = arith.constant dense<0.000000e+00> : vector<16x54xf32>
    %23 = tpu.matmul %22, %21, %cst {dimension_numbers = #tpu.dot_dimension_numbers<[1], [0], [0], [1], [0, 0, 1, 1], [], []>} : vector<16x40xf32>, vector<40x54xf32>, vector<16x54xf32> -> vector<16x54xf32>
    %c0_9 = arith.constant 0 : index
    %c0_10 = arith.constant 0 : index
    %24 = vector.load %arg3[%c0_9, %c0_10] : memref<16x1xf32, #tpu.memory_space<vmem>>, vector<16x1xf32>
    %25 = vector.broadcast %24 : vector<16x1xf32> to vector<16x54xf32>
    %26 = arith.mulf %23, %25 : vector<16x54xf32>
    %c0_11 = arith.constant 0 : index
    %c0_12 = arith.constant 0 : index
    %27 = vector.load %arg4[%c0_11, %c0_12] : memref<16x1xf32, #tpu.memory_space<vmem>>, vector<16x1xf32>
    %28 = vector.broadcast %27 : vector<16x1xf32> to vector<16x54xf32>
    %29 = arith.addf %26, %28 : vector<16x54xf32>
    %cst_13 = arith.constant 0.000000e+00 : f32
    %30 = vector.broadcast %cst_13 : f32 to vector<16x54xf32>
    %31 = arith.maximumf %29, %30 : vector<16x54xf32>
    %32 = vector.extract_strided_slice %31 {offsets = [0, 0], sizes = [16, 50], strides = [1, 1]} : vector<16x54xf32> to vector<16x50xf32>
    %c0_14 = arith.constant 0 : index
    %c0_15 = arith.constant 0 : index
    %33 = vector.load %arg9[%c0_14, %c0_15] : memref<5x50xf32, #tpu.memory_space<vmem>>, vector<1x50xf32>
    %34 = vector.broadcast %33 : vector<1x50xf32> to vector<16x50xf32>
    %35 = arith.mulf %32, %34 : vector<16x50xf32>
    %36 = vector.extract_strided_slice %31 {offsets = [0, 1], sizes = [16, 50], strides = [1, 1]} : vector<16x54xf32> to vector<16x50xf32>
    %c1_16 = arith.constant 1 : index
    %c0_17 = arith.constant 0 : index
    %37 = vector.load %arg9[%c1_16, %c0_17] : memref<5x50xf32, #tpu.memory_space<vmem>>, vector<1x50xf32>
    %38 = vector.broadcast %37 : vector<1x50xf32> to vector<16x50xf32>
    %39 = arith.mulf %36, %38 : vector<16x50xf32>
    %40 = vector.extract_strided_slice %31 {offsets = [0, 2], sizes = [16, 50], strides = [1, 1]} : vector<16x54xf32> to vector<16x50xf32>
    %c2_18 = arith.constant 2 : index
    %c0_19 = arith.constant 0 : index
    %41 = vector.load %arg9[%c2_18, %c0_19] : memref<5x50xf32, #tpu.memory_space<vmem>>, vector<1x50xf32>
    %42 = vector.broadcast %41 : vector<1x50xf32> to vector<16x50xf32>
    %43 = arith.mulf %40, %42 : vector<16x50xf32>
    %44 = vector.extract_strided_slice %31 {offsets = [0, 3], sizes = [16, 50], strides = [1, 1]} : vector<16x54xf32> to vector<16x50xf32>
    %c3_20 = arith.constant 3 : index
    %c0_21 = arith.constant 0 : index
    %45 = vector.load %arg9[%c3_20, %c0_21] : memref<5x50xf32, #tpu.memory_space<vmem>>, vector<1x50xf32>
    %46 = vector.broadcast %45 : vector<1x50xf32> to vector<16x50xf32>
    %47 = arith.mulf %44, %46 : vector<16x50xf32>
    %48 = vector.extract_strided_slice %31 {offsets = [0, 4], sizes = [16, 50], strides = [1, 1]} : vector<16x54xf32> to vector<16x50xf32>
    %c4_22 = arith.constant 4 : index
    %c0_23 = arith.constant 0 : index
    %49 = vector.load %arg9[%c4_22, %c0_23] : memref<5x50xf32, #tpu.memory_space<vmem>>, vector<1x50xf32>
    %50 = vector.broadcast %49 : vector<1x50xf32> to vector<16x50xf32>
    %51 = arith.mulf %48, %50 : vector<16x50xf32>
    %52 = tpu.concatenate %35, %39, %43, %47, %51 in 0 : vector<16x50xf32>, vector<16x50xf32>, vector<16x50xf32>, vector<16x50xf32>, vector<16x50xf32> -> vector<80x50xf32>
    %c0_24 = arith.constant 0 : index
    %c0_25 = arith.constant 0 : index
    %53 = vector.load %arg6[%c0_24, %c0_25] : memref<16x80xf32, #tpu.memory_space<vmem>>, vector<16x80xf32>
    %cst_26 = arith.constant dense<0.000000e+00> : vector<16x50xf32>
    %54 = tpu.matmul %53, %52, %cst_26 {dimension_numbers = #tpu.dot_dimension_numbers<[1], [0], [0], [1], [0, 0, 1, 1], [], []>} : vector<16x80xf32>, vector<80x50xf32>, vector<16x50xf32> -> vector<16x50xf32>
    %c0_27 = arith.constant 0 : index
    %c0_28 = arith.constant 0 : index
    %55 = vector.load %arg7[%c0_27, %c0_28] : memref<16x1xf32, #tpu.memory_space<vmem>>, vector<16x1xf32>
    %56 = vector.broadcast %55 : vector<16x1xf32> to vector<16x50xf32>
    %57 = arith.mulf %54, %56 : vector<16x50xf32>
    %c0_29 = arith.constant 0 : index
    %c0_30 = arith.constant 0 : index
    %58 = vector.load %arg8[%c0_29, %c0_30] : memref<16x1xf32, #tpu.memory_space<vmem>>, vector<16x1xf32>
    %59 = vector.broadcast %58 : vector<16x1xf32> to vector<16x50xf32>
    %60 = arith.addf %57, %59 : vector<16x50xf32>
    %cst_31 = arith.constant 0.000000e+00 : f32
    %61 = vector.broadcast %cst_31 : f32 to vector<16x50xf32>
    %62 = arith.maximumf %60, %61 : vector<16x50xf32>
    %63 = vector.extract_strided_slice %62 {offsets = [0, 0], sizes = [16, 48], strides = [1, 1]} : vector<16x50xf32> to vector<16x48xf32>
    %c0_32 = arith.constant 0 : index
    %c0_33 = arith.constant 0 : index
    %64 = vector.load %arg13[%c0_32, %c0_33] : memref<3x48xf32, #tpu.memory_space<vmem>>, vector<1x48xf32>
    %65 = vector.broadcast %64 : vector<1x48xf32> to vector<16x48xf32>
    %66 = arith.mulf %63, %65 : vector<16x48xf32>
    %67 = vector.extract_strided_slice %62 {offsets = [0, 1], sizes = [16, 48], strides = [1, 1]} : vector<16x50xf32> to vector<16x48xf32>
    %c1_34 = arith.constant 1 : index
    %c0_35 = arith.constant 0 : index
    %68 = vector.load %arg13[%c1_34, %c0_35] : memref<3x48xf32, #tpu.memory_space<vmem>>, vector<1x48xf32>
    %69 = vector.broadcast %68 : vector<1x48xf32> to vector<16x48xf32>
    %70 = arith.mulf %67, %69 : vector<16x48xf32>
    %71 = vector.extract_strided_slice %62 {offsets = [0, 2], sizes = [16, 48], strides = [1, 1]} : vector<16x50xf32> to vector<16x48xf32>
    %c2_36 = arith.constant 2 : index
    %c0_37 = arith.constant 0 : index
    %72 = vector.load %arg13[%c2_36, %c0_37] : memref<3x48xf32, #tpu.memory_space<vmem>>, vector<1x48xf32>
    %73 = vector.broadcast %72 : vector<1x48xf32> to vector<16x48xf32>
    %74 = arith.mulf %71, %73 : vector<16x48xf32>
    %75 = tpu.concatenate %66, %70, %74 in 0 : vector<16x48xf32>, vector<16x48xf32>, vector<16x48xf32> -> vector<48x48xf32>
    %c0_38 = arith.constant 0 : index
    %c0_39 = arith.constant 0 : index
    %76 = vector.load %arg10[%c0_38, %c0_39] : memref<1x48xf32, #tpu.memory_space<vmem>>, vector<1x48xf32>
    %cst_40 = arith.constant dense<0.000000e+00> : vector<1x48xf32>
    %77 = tpu.matmul %76, %75, %cst_40 {dimension_numbers = #tpu.dot_dimension_numbers<[1], [0], [0], [1], [0, 0, 1, 1], [], []>} : vector<1x48xf32>, vector<48x48xf32>, vector<1x48xf32> -> vector<1x48xf32>
    %c0_41 = arith.constant 0 : index
    %c0_42 = arith.constant 0 : index
    %78 = vector.load %arg11[%c0_41, %c0_42] : memref<1x1xf32, #tpu.memory_space<vmem>>, vector<1x1xf32>
    %79 = vector.broadcast %78 : vector<1x1xf32> to vector<1x48xf32>
    %80 = arith.mulf %77, %79 : vector<1x48xf32>
    %c0_43 = arith.constant 0 : index
    %c0_44 = arith.constant 0 : index
    %81 = vector.load %arg12[%c0_43, %c0_44] : memref<1x1xf32, #tpu.memory_space<vmem>>, vector<1x1xf32>
    %82 = vector.broadcast %81 : vector<1x1xf32> to vector<1x48xf32>
    %83 = arith.addf %80, %82 : vector<1x48xf32>
    %84 = arith.negf %83 : vector<1x48xf32>
    %85 = math.exp %84 : vector<1x48xf32>
    %cst_45 = arith.constant 1.000000e+00 : f32
    %86 = vector.broadcast %cst_45 : f32 to vector<1x48xf32>
    %87 = arith.addf %86, %85 : vector<1x48xf32>
    %88 = arith.divf %86, %87 : vector<1x48xf32>
    %c0_46 = arith.constant 0 : index
    %c0_47 = arith.constant 0 : index
    %89 = vector.load %arg1[%c0_46, %c0_47] : memref<8x22xf32, #tpu.memory_space<vmem>>, vector<8x22xf32>
    %90 = vector.extract_strided_slice %89 {offsets = [0, 0], sizes = [8, 18], strides = [1, 1]} : vector<8x22xf32> to vector<8x18xf32>
    %c0_48 = arith.constant 0 : index
    %c0_49 = arith.constant 0 : index
    %91 = vector.load %arg17[%c0_48, %c0_49] : memref<5x18xf32, #tpu.memory_space<vmem>>, vector<1x18xf32>
    %92 = vector.broadcast %91 : vector<1x18xf32> to vector<8x18xf32>
    %93 = arith.mulf %90, %92 : vector<8x18xf32>
    %94 = vector.extract_strided_slice %89 {offsets = [0, 1], sizes = [8, 18], strides = [1, 1]} : vector<8x22xf32> to vector<8x18xf32>
    %c1_50 = arith.constant 1 : index
    %c0_51 = arith.constant 0 : index
    %95 = vector.load %arg17[%c1_50, %c0_51] : memref<5x18xf32, #tpu.memory_space<vmem>>, vector<1x18xf32>
    %96 = vector.broadcast %95 : vector<1x18xf32> to vector<8x18xf32>
    %97 = arith.mulf %94, %96 : vector<8x18xf32>
    %98 = vector.extract_strided_slice %89 {offsets = [0, 2], sizes = [8, 18], strides = [1, 1]} : vector<8x22xf32> to vector<8x18xf32>
    %c2_52 = arith.constant 2 : index
    %c0_53 = arith.constant 0 : index
    %99 = vector.load %arg17[%c2_52, %c0_53] : memref<5x18xf32, #tpu.memory_space<vmem>>, vector<1x18xf32>
    %100 = vector.broadcast %99 : vector<1x18xf32> to vector<8x18xf32>
    %101 = arith.mulf %98, %100 : vector<8x18xf32>
    %102 = vector.extract_strided_slice %89 {offsets = [0, 3], sizes = [8, 18], strides = [1, 1]} : vector<8x22xf32> to vector<8x18xf32>
    %c3_54 = arith.constant 3 : index
    %c0_55 = arith.constant 0 : index
    %103 = vector.load %arg17[%c3_54, %c0_55] : memref<5x18xf32, #tpu.memory_space<vmem>>, vector<1x18xf32>
    %104 = vector.broadcast %103 : vector<1x18xf32> to vector<8x18xf32>
    %105 = arith.mulf %102, %104 : vector<8x18xf32>
    %106 = vector.extract_strided_slice %89 {offsets = [0, 4], sizes = [8, 18], strides = [1, 1]} : vector<8x22xf32> to vector<8x18xf32>
    %c4_56 = arith.constant 4 : index
    %c0_57 = arith.constant 0 : index
    %107 = vector.load %arg17[%c4_56, %c0_57] : memref<5x18xf32, #tpu.memory_space<vmem>>, vector<1x18xf32>
    %108 = vector.broadcast %107 : vector<1x18xf32> to vector<8x18xf32>
    %109 = arith.mulf %106, %108 : vector<8x18xf32>
    %110 = tpu.concatenate %93, %97, %101, %105, %109 in 0 : vector<8x18xf32>, vector<8x18xf32>, vector<8x18xf32>, vector<8x18xf32>, vector<8x18xf32> -> vector<40x18xf32>
    %c0_58 = arith.constant 0 : index
    %c0_59 = arith.constant 0 : index
    %111 = vector.load %arg14[%c0_58, %c0_59] : memref<16x40xf32, #tpu.memory_space<vmem>>, vector<16x40xf32>
    %cst_60 = arith.constant dense<0.000000e+00> : vector<16x18xf32>
    %112 = tpu.matmul %111, %110, %cst_60 {dimension_numbers = #tpu.dot_dimension_numbers<[1], [0], [0], [1], [0, 0, 1, 1], [], []>} : vector<16x40xf32>, vector<40x18xf32>, vector<16x18xf32> -> vector<16x18xf32>
    %c0_61 = arith.constant 0 : index
    %c0_62 = arith.constant 0 : index
    %113 = vector.load %arg15[%c0_61, %c0_62] : memref<16x1xf32, #tpu.memory_space<vmem>>, vector<16x1xf32>
    %114 = vector.broadcast %113 : vector<16x1xf32> to vector<16x18xf32>
    %115 = arith.mulf %112, %114 : vector<16x18xf32>
    %c0_63 = arith.constant 0 : index
    %c0_64 = arith.constant 0 : index
    %116 = vector.load %arg16[%c0_63, %c0_64] : memref<16x1xf32, #tpu.memory_space<vmem>>, vector<16x1xf32>
    %117 = vector.broadcast %116 : vector<16x1xf32> to vector<16x18xf32>
    %118 = arith.addf %115, %117 : vector<16x18xf32>
    %cst_65 = arith.constant 0.000000e+00 : f32
    %119 = vector.broadcast %cst_65 : f32 to vector<16x18xf32>
    %120 = arith.maximumf %118, %119 : vector<16x18xf32>
    %121 = vector.extract_strided_slice %120 {offsets = [0, 0], sizes = [16, 14], strides = [1, 1]} : vector<16x18xf32> to vector<16x14xf32>
    %c0_66 = arith.constant 0 : index
    %c0_67 = arith.constant 0 : index
    %122 = vector.load %arg21[%c0_66, %c0_67] : memref<5x14xf32, #tpu.memory_space<vmem>>, vector<1x14xf32>
    %123 = vector.broadcast %122 : vector<1x14xf32> to vector<16x14xf32>
    %124 = arith.mulf %121, %123 : vector<16x14xf32>
    %125 = vector.extract_strided_slice %120 {offsets = [0, 1], sizes = [16, 14], strides = [1, 1]} : vector<16x18xf32> to vector<16x14xf32>
    %c1_68 = arith.constant 1 : index
    %c0_69 = arith.constant 0 : index
    %126 = vector.load %arg21[%c1_68, %c0_69] : memref<5x14xf32, #tpu.memory_space<vmem>>, vector<1x14xf32>
    %127 = vector.broadcast %126 : vector<1x14xf32> to vector<16x14xf32>
    %128 = arith.mulf %125, %127 : vector<16x14xf32>
    %129 = vector.extract_strided_slice %120 {offsets = [0, 2], sizes = [16, 14], strides = [1, 1]} : vector<16x18xf32> to vector<16x14xf32>
    %c2_70 = arith.constant 2 : index
    %c0_71 = arith.constant 0 : index
    %130 = vector.load %arg21[%c2_70, %c0_71] : memref<5x14xf32, #tpu.memory_space<vmem>>, vector<1x14xf32>
    %131 = vector.broadcast %130 : vector<1x14xf32> to vector<16x14xf32>
    %132 = arith.mulf %129, %131 : vector<16x14xf32>
    %133 = vector.extract_strided_slice %120 {offsets = [0, 3], sizes = [16, 14], strides = [1, 1]} : vector<16x18xf32> to vector<16x14xf32>
    %c3_72 = arith.constant 3 : index
    %c0_73 = arith.constant 0 : index
    %134 = vector.load %arg21[%c3_72, %c0_73] : memref<5x14xf32, #tpu.memory_space<vmem>>, vector<1x14xf32>
    %135 = vector.broadcast %134 : vector<1x14xf32> to vector<16x14xf32>
    %136 = arith.mulf %133, %135 : vector<16x14xf32>
    %137 = vector.extract_strided_slice %120 {offsets = [0, 4], sizes = [16, 14], strides = [1, 1]} : vector<16x18xf32> to vector<16x14xf32>
    %c4_74 = arith.constant 4 : index
    %c0_75 = arith.constant 0 : index
    %138 = vector.load %arg21[%c4_74, %c0_75] : memref<5x14xf32, #tpu.memory_space<vmem>>, vector<1x14xf32>
    %139 = vector.broadcast %138 : vector<1x14xf32> to vector<16x14xf32>
    %140 = arith.mulf %137, %139 : vector<16x14xf32>
    %141 = tpu.concatenate %124, %128, %132, %136, %140 in 0 : vector<16x14xf32>, vector<16x14xf32>, vector<16x14xf32>, vector<16x14xf32>, vector<16x14xf32> -> vector<80x14xf32>
    %c0_76 = arith.constant 0 : index
    %c0_77 = arith.constant 0 : index
    %142 = vector.load %arg18[%c0_76, %c0_77] : memref<16x80xf32, #tpu.memory_space<vmem>>, vector<16x80xf32>
    %cst_78 = arith.constant dense<0.000000e+00> : vector<16x14xf32>
    %143 = tpu.matmul %142, %141, %cst_78 {dimension_numbers = #tpu.dot_dimension_numbers<[1], [0], [0], [1], [0, 0, 1, 1], [], []>} : vector<16x80xf32>, vector<80x14xf32>, vector<16x14xf32> -> vector<16x14xf32>
    %c0_79 = arith.constant 0 : index
    %c0_80 = arith.constant 0 : index
    %144 = vector.load %arg19[%c0_79, %c0_80] : memref<16x1xf32, #tpu.memory_space<vmem>>, vector<16x1xf32>
    %145 = vector.broadcast %144 : vector<16x1xf32> to vector<16x14xf32>
    %146 = arith.mulf %143, %145 : vector<16x14xf32>
    %c0_81 = arith.constant 0 : index
    %c0_82 = arith.constant 0 : index
    %147 = vector.load %arg20[%c0_81, %c0_82] : memref<16x1xf32, #tpu.memory_space<vmem>>, vector<16x1xf32>
    %148 = vector.broadcast %147 : vector<16x1xf32> to vector<16x14xf32>
    %149 = arith.addf %146, %148 : vector<16x14xf32>
    %cst_83 = arith.constant 0.000000e+00 : f32
    %150 = vector.broadcast %cst_83 : f32 to vector<16x14xf32>
    %151 = arith.maximumf %149, %150 : vector<16x14xf32>
    %c0_84 = arith.constant 0 : index
    %c0_85 = arith.constant 0 : index
    %152 = vector.load %arg22[%c0_84, %c0_85] : memref<1x16xf32, #tpu.memory_space<vmem>>, vector<1x16xf32>
    %cst_86 = arith.constant dense<0.000000e+00> : vector<1x14xf32>
    %153 = tpu.matmul %152, %151, %cst_86 {dimension_numbers = #tpu.dot_dimension_numbers<[1], [0], [0], [1], [0, 0, 1, 1], [], []>} : vector<1x16xf32>, vector<16x14xf32>, vector<1x14xf32> -> vector<1x14xf32>
    %c0_87 = arith.constant 0 : index
    %c0_88 = arith.constant 0 : index
    %154 = vector.load %arg24[%c0_87, %c0_88] : memref<14x48xf32, #tpu.memory_space<vmem>>, vector<14x48xf32>
    %cst_89 = arith.constant dense<0.000000e+00> : vector<1x48xf32>
    %155 = tpu.matmul %153, %154, %cst_89 {dimension_numbers = #tpu.dot_dimension_numbers<[1], [0], [0], [1], [0, 0, 1, 1], [], []>} : vector<1x14xf32>, vector<14x48xf32>, vector<1x48xf32> -> vector<1x48xf32>
    %c0_90 = arith.constant 0 : index
    %c0_91 = arith.constant 0 : index
    %156 = vector.load %arg23[%c0_90, %c0_91] : memref<1x1xf32, #tpu.memory_space<vmem>>, vector<1x1xf32>
    %157 = vector.broadcast %156 : vector<1x1xf32> to vector<1x48xf32>
    %158 = arith.addf %155, %157 : vector<1x48xf32>
    %159 = arith.negf %158 : vector<1x48xf32>
    %160 = math.exp %159 : vector<1x48xf32>
    %cst_92 = arith.constant 1.000000e+00 : f32
    %161 = vector.broadcast %cst_92 : f32 to vector<1x48xf32>
    %162 = arith.addf %161, %160 : vector<1x48xf32>
    %163 = arith.divf %161, %162 : vector<1x48xf32>
    %cst_93 = arith.constant 5.000000e+00 : f32
    %164 = vector.broadcast %cst_93 : f32 to vector<1x48xf32>
    %165 = arith.mulf %164, %88 : vector<1x48xf32>
    %166 = arith.mulf %165, %163 : vector<1x48xf32>
    %c0_94 = arith.constant 0 : index
    %c0_95 = arith.constant 0 : index
    %167 = vector.load %arg25[%c0_94, %c0_95] : memref<1x48xf32, #tpu.memory_space<vmem>>, vector<1x48xf32>
    %168 = arith.mulf %166, %167 : vector<1x48xf32>
    %c0_96 = arith.constant 0 : index
    %c0_97 = arith.constant 0 : index
    %169 = vector.load %arg26[%c0_96, %c0_97] : memref<1x48xf32, #tpu.memory_space<vmem>>, vector<1x48xf32>
    tpu.vector_store %arg26[%c0_96, %c0_97], %168 {strides = array<i32>} : memref<1x48xf32, #tpu.memory_space<vmem>>, vector<1x48xf32>,
    return
  }
}

</mosaic_0001>

<llo_original>
// kernel: tpu_custom_call.1
$region0: #{tpu_custom_call.1}
  #allocation0 [shape = 'u32[]', space=smem, size = 0x4, offset = 0x4, fixed_abs, tag = 'smem constant byte address 0x4 - core index']
  #allocation1 [shape = 'u32[72,128]{1,0:T(1,128)}', space=vmem, size = 0x9000, scoped, tag = 'internal scratch']
  #allocation2 [shape = 'f32[1,1]{1,0:T(1,128)S(1)}', space=vmem, size = 0x200, scoped, tag = 'scoped memory for tpu_custom_call.1']
  #allocation3 [shape = 'f32[1,1]{1,0:T(1,128)S(1)}', space=vmem, size = 0x200, scoped, tag = 'scoped memory for tpu_custom_call.1']
  #allocation4 [shape = 'f32[1,1]{1,0:T(1,128)S(1)}', space=vmem, size = 0x200, scoped, tag = 'scoped memory for tpu_custom_call.1']
  %s0 = inlined_call_operand.vmem [shape: f32[8,58], index: 0, kind: input, shape index: {}]
  %s1 = inlined_call_operand.vmem [shape: f32[8,22], index: 1, kind: input, shape index: {}]
  %s2 = inlined_call_operand.vmem [shape: f32[16,40], index: 2, kind: input, shape index: {}]
  %s3 = inlined_call_operand.vmem [shape: f32[16,1], index: 3, kind: input, shape index: {}]
  %s4 = inlined_call_operand.vmem [shape: f32[16,1], index: 4, kind: input, shape index: {}]
  %s5 = inlined_call_operand.vmem [shape: f32[5,54], index: 5, kind: input, shape index: {}]
  %s6 = inlined_call_operand.vmem [shape: f32[16,80], index: 6, kind: input, shape index: {}]
  %s7 = inlined_call_operand.vmem [shape: f32[16,1], index: 7, kind: input, shape index: {}]
  %s8 = inlined_call_operand.vmem [shape: f32[16,1], index: 8, kind: input, shape index: {}]
  %s9 = inlined_call_operand.vmem [shape: f32[5,50], index: 9, kind: input, shape index: {}]
  %s10 = inlined_call_operand.vmem [shape: f32[1,48], index: 10, kind: input, shape index: {}]
  %s11 = inlined_call_operand.<no memory space> [shape: f32[1,1], index: 11, kind: input, shape index: {}]
  %s12 = inlined_call_operand.<no memory space> [shape: f32[1,1], index: 12, kind: input, shape index: {}]
  %s13 = inlined_call_operand.vmem [shape: f32[3,48], index: 13, kind: input, shape index: {}]
  %s14 = inlined_call_operand.vmem [shape: f32[16,40], index: 14, kind: input, shape index: {}]
  %s15 = inlined_call_operand.vmem [shape: f32[16,1], index: 15, kind: input, shape index: {}]
  %s16 = inlined_call_operand.vmem [shape: f32[16,1], index: 16, kind: input, shape index: {}]
  %s17 = inlined_call_operand.vmem [shape: f32[5,18], index: 17, kind: input, shape index: {}]
  %s18 = inlined_call_operand.vmem [shape: f32[16,80], index: 18, kind: input, shape index: {}]
  %s19 = inlined_call_operand.vmem [shape: f32[16,1], index: 19, kind: input, shape index: {}]
  %s20 = inlined_call_operand.vmem [shape: f32[16,1], index: 20, kind: input, shape index: {}]
  %s21 = inlined_call_operand.vmem [shape: f32[5,14], index: 21, kind: input, shape index: {}]
  %s22 = inlined_call_operand.vmem [shape: f32[1,16], index: 22, kind: input, shape index: {}]
  %s23 = inlined_call_operand.<no memory space> [shape: f32[1,1], index: 23, kind: input, shape index: {}]
  %s24 = inlined_call_operand.vmem [shape: f32[14,48], index: 24, kind: input, shape index: {}]
  %s25 = inlined_call_operand.vmem [shape: f32[1,48], index: 25, kind: input, shape index: {}]
  %s26 = inlined_call_operand.hbm [shape: f32[1,48], index: 26, kind: output, shape index: {}]
  %s27 = sld [smem:[#allocation0]]
  $region114: #{tpu_custom_call.1} parent=0
    _
  %s29 = ssub.s32 1, %s27
  %s30 = scalar_select 0, %s29, %s27
  %v31 = vstv %s11
  %32 = vst [vmem:[#allocation2] sm:$0x1] %v31
  %v33 = vstv %s12
  %34 = vst [vmem:[#allocation3] sm:$0x1] %v33
  %v35 = vstv %s23
  %36 = vst [vmem:[#allocation4] sm:$0x1] %v35
  $region1: #{tpu_custom_call.1} parent=0
    #allocation5 [shape = 'u8[512]{0}', space=vmem, size = 0x400, scoped, tag = 'output window, operand 0, single buffered']
    #allocation6 [shape = 's32[1]{0}', space=sflag, size = 0x4, scoped, tag = 'scoped memory for tpu_custom_call.1']
    %37 = vsyncpa [#allocation6], 0
    // Predicated region
    $region2: #{tpu_custom_call.1} parent=1 // pred_check
      _
    $region3: #{tpu_custom_call.1} parent=1 // pred_check_branch
      %39 = sbr.rel (0) target = $region5
    $region4: #{tpu_custom_call.1} parent=1 // pred_region
      _
    $region5: #{tpu_custom_call.1} parent=1 // pred_fallthru
      _
    // Predicated region
    $region6: #{tpu_custom_call.1} parent=1 // pred_check
      _
    $region7: #{tpu_custom_call.1} parent=1 // pred_check_branch
      %41 = sbr.rel (0) target = $region9
    $region8: #{tpu_custom_call.1} parent=1 // pred_region
      _
    $region9: #{tpu_custom_call.1} parent=1 // pred_fallthru
      _
    // Predicated region
    $region10: #{tpu_custom_call.1} parent=1 // pred_check
      _
    $region11: #{tpu_custom_call.1} parent=1 // pred_check_branch
      %43 = sbr.rel (0) target = $region13
    $region12: #{tpu_custom_call.1} parent=1 // pred_region
      _
    $region13: #{tpu_custom_call.1} parent=1 // pred_fallthru
      _
    // Predicated region
    $region14: #{tpu_custom_call.1} parent=1 // pred_check
      _
    $region15: #{tpu_custom_call.1} parent=1 // pred_check_branch
      %45 = sbr.rel (0) target = $region17
    $region16: #{tpu_custom_call.1} parent=1 // pred_region
      _
    $region17: #{tpu_custom_call.1} parent=1 // pred_fallthru
      _
    // Predicated region
    $region18: #{tpu_custom_call.1} parent=1 // pred_check
      _
    $region19: #{tpu_custom_call.1} parent=1 // pred_check_branch
      %47 = sbr.rel (0) target = $region21
    $region20: #{tpu_custom_call.1} parent=1 // pred_region
      _
    $region21: #{tpu_custom_call.1} parent=1 // pred_fallthru
      _
    // Predicated region
    $region22: #{tpu_custom_call.1} parent=1 // pred_check
      _
    $region23: #{tpu_custom_call.1} parent=1 // pred_check_branch
      %49 = sbr.rel (0) target = $region25
    $region24: #{tpu_custom_call.1} parent=1 // pred_region
      _
    $region25: #{tpu_custom_call.1} parent=1 // pred_fallthru
      _
    // Predicated region
    $region26: #{tpu_custom_call.1} parent=1 // pred_check
      _
    $region27: #{tpu_custom_call.1} parent=1 // pred_check_branch
      %51 = sbr.rel (0) target = $region29
    $region28: #{tpu_custom_call.1} parent=1 // pred_region
      _
    $region29: #{tpu_custom_call.1} parent=1 // pred_fallthru
      _
    // Predicated region
    $region30: #{tpu_custom_call.1} parent=1 // pred_check
      _
    $region31: #{tpu_custom_call.1} parent=1 // pred_check_branch
      %53 = sbr.rel (0) target = $region33
    $region32: #{tpu_custom_call.1} parent=1 // pred_region
      _
    $region33: #{tpu_custom_call.1} parent=1 // pred_fallthru
      _
    // Predicated region
    $region34: #{tpu_custom_call.1} parent=1 // pred_check
      _
    $region35: #{tpu_custom_call.1} parent=1 // pred_check_branch
      %55 = sbr.rel (0) target = $region37
    $region36: #{tpu_custom_call.1} parent=1 // pred_region
      _
    $region37: #{tpu_custom_call.1} parent=1 // pred_fallthru
      _
    // Predicated region
    $region38: #{tpu_custom_call.1} parent=1 // pred_check
      _
    $region39: #{tpu_custom_call.1} parent=1 // pred_check_branch
      %57 = sbr.rel (0) target = $region41
    $region40: #{tpu_custom_call.1} parent=1 // pred_region
      _
    $region41: #{tpu_custom_call.1} parent=1 // pred_fallthru
      _
    // Predicated region
    $region42: #{tpu_custom_call.1} parent=1 // pred_check
      _
    $region43: #{tpu_custom_call.1} parent=1 // pred_check_branch
      %59 = sbr.rel (0) target = $region45
    $region44: #{tpu_custom_call.1} parent=1 // pred_region
      _
    $region45: #{tpu_custom_call.1} parent=1 // pred_fallthru
      _
    // Predicated region
    $region46: #{tpu_custom_call.1} parent=1 // pred_check
      _
    $region47: #{tpu_custom_call.1} parent=1 // pred_check_branch
      %61 = sbr.rel (0) target = $region49
    $region48: #{tpu_custom_call.1} parent=1 // pred_region
      _
    $region49: #{tpu_custom_call.1} parent=1 // pred_fallthru
      _
    // Predicated region
    $region50: #{tpu_custom_call.1} parent=1 // pred_check
      _
    $region51: #{tpu_custom_call.1} parent=1 // pred_check_branch
      %63 = sbr.rel (0) target = $region53
    $region52: #{tpu_custom_call.1} parent=1 // pred_region
      _
    $region53: #{tpu_custom_call.1} parent=1 // pred_fallthru
      _
    // Predicated region
    $region54: #{tpu_custom_call.1} parent=1 // pred_check
      _
    $region55: #{tpu_custom_call.1} parent=1 // pred_check_branch
      %65 = sbr.rel (0) target = $region57
    $region56: #{tpu_custom_call.1} parent=1 // pred_region
      _
    $region57: #{tpu_custom_call.1} parent=1 // pred_fallthru
      _
    // Predicated region
    $region58: #{tpu_custom_call.1} parent=1 // pred_check
      _
    $region59: #{tpu_custom_call.1} parent=1 // pred_check_branch
      %67 = sbr.rel (0) target = $region61
    $region60: #{tpu_custom_call.1} parent=1 // pred_region
      _
    $region61: #{tpu_custom_call.1} parent=1 // pred_fallthru
      _
    // Predicated region
    $region62: #{tpu_custom_call.1} parent=1 // pred_check
      _
    $region63: #{tpu_custom_call.1} parent=1 // pred_check_branch
      %69 = sbr.rel (0) target = $region65
    $region64: #{tpu_custom_call.1} parent=1 // pred_region
      _
    $region65: #{tpu_custom_call.1} parent=1 // pred_fallthru
      _
    // Predicated region
    $region66: #{tpu_custom_call.1} parent=1 // pred_check
      _
    $region67: #{tpu_custom_call.1} parent=1 // pred_check_branch
      %71 = sbr.rel (0) target = $region69
    $region68: #{tpu_custom_call.1} parent=1 // pred_region
      _
    $region69: #{tpu_custom_call.1} parent=1 // pred_fallthru
      _
    // Predicated region
    $region70: #{tpu_custom_call.1} parent=1 // pred_check
      _
    $region71: #{tpu_custom_call.1} parent=1 // pred_check_branch
      %73 = sbr.rel (0) target = $region73
    $region72: #{tpu_custom_call.1} parent=1 // pred_region
      _
    $region73: #{tpu_custom_call.1} parent=1 // pred_fallthru
      _
    // Predicated region
    $region74: #{tpu_custom_call.1} parent=1 // pred_check
      _
    $region75: #{tpu_custom_call.1} parent=1 // pred_check_branch
      %75 = sbr.rel (0) target = $region77
    $region76: #{tpu_custom_call.1} parent=1 // pred_region
      _
    $region77: #{tpu_custom_call.1} parent=1 // pred_fallthru
      _
    // Predicated region
    $region78: #{tpu_custom_call.1} parent=1 // pred_check
      _
    $region79: #{tpu_custom_call.1} parent=1 // pred_check_branch
      %77 = sbr.rel (0) target = $region81
    $region80: #{tpu_custom_call.1} parent=1 // pred_region
      _
    $region81: #{tpu_custom_call.1} parent=1 // pred_fallthru
      _
    // Predicated region
    $region82: #{tpu_custom_call.1} parent=1 // pred_check
      _
    $region83: #{tpu_custom_call.1} parent=1 // pred_check_branch
      %79 = sbr.rel (0) target = $region85
    $region84: #{tpu_custom_call.1} parent=1 // pred_region
      _
    $region85: #{tpu_custom_call.1} parent=1 // pred_fallthru
      _
    // Predicated region
    $region86: #{tpu_custom_call.1} parent=1 // pred_check
      _
    $region87: #{tpu_custom_call.1} parent=1 // pred_check_branch
      %81 = sbr.rel (0) target = $region89
    $region88: #{tpu_custom_call.1} parent=1 // pred_region
      _
    $region89: #{tpu_custom_call.1} parent=1 // pred_fallthru
      _
    // Predicated region
    $region90: #{tpu_custom_call.1} parent=1 // pred_check
      _
    $region91: #{tpu_custom_call.1} parent=1 // pred_check_branch
      %83 = sbr.rel (0) target = $region93
    $region92: #{tpu_custom_call.1} parent=1 // pred_region
      _
    $region93: #{tpu_custom_call.1} parent=1 // pred_fallthru
      _
    // Predicated region
    $region94: #{tpu_custom_call.1} parent=1 // pred_check
      _
    $region95: #{tpu_custom_call.1} parent=1 // pred_check_branch
      %85 = sbr.rel (0) target = $region97
    $region96: #{tpu_custom_call.1} parent=1 // pred_region
      _
    $region97: #{tpu_custom_call.1} parent=1 // pred_fallthru
      _
    // Predicated region
    $region98: #{tpu_custom_call.1} parent=1 // pred_check
      _
    $region99: #{tpu_custom_call.1} parent=1 // pred_check_branch
      %87 = sbr.rel (0) target = $region101
    $region100: #{tpu_custom_call.1} parent=1 // pred_region
      _
    $region101: #{tpu_custom_call.1} parent=1 // pred_fallthru
      _
    // Predicated region
    $region102: #{tpu_custom_call.1} parent=1 // pred_check
      _
    $region103: #{tpu_custom_call.1} parent=1 // pred_check_branch
      %89 = sbr.rel (0) target = $region105
    $region104: #{tpu_custom_call.1} parent=1 // pred_region
      _
    $region105: #{tpu_custom_call.1} parent=1 // pred_fallthru
      _
    %v90 = vld [vmem:[%s0] sm:$0xff]
    %v91 = vld [vmem:[%s5] sm:$0x1]
    %v92 = vperm.slane %v91, 0
    %v93 = vmul.f32 %v90, %v92
    %v94 = vld [vmem:[%s5 + $0x1] sm:$0x1]
    %v95 = vperm.slane %v94, 0
    %97 = vrot.lane.b32.xlu0 %v95, 1
    %v98 = vpop.permute.xlu0 %97
    %v100 = vmul.f32 %v90, %v98
    %v101 = vld [vmem:[%s5 + $0x2] sm:$0x1]
    %v102 = vperm.slane %v101, 0
    %104 = vrot.lane.b32.xlu0 %v102, 2
    %v105 = vpop.permute.xlu0 %104
    %v107 = vmul.f32 %v90, %v105
    %v108 = vld [vmem:[%s5 + $0x3] sm:$0x1]
    %v109 = vperm.slane %v108, 0
    %111 = vrot.lane.b32.xlu0 %v109, 3
    %v112 = vpop.permute.xlu0 %111
    %v114 = vmul.f32 %v90, %v112
    %v115 = vld [vmem:[%s5 + $0x4] sm:$0x1]
    %v116 = vperm.slane %v115, 0
    %118 = vrot.lane.b32.xlu0 %v116, 4
    %v119 = vpop.permute.xlu0 %118
    %v121 = vmul.f32 %v90, %v119
    %123 = vrot.lane.b32.xlu0 %v100, 127
    %v124 = vpop.permute.xlu0 %123
    %127 = vrot.lane.b32.xlu0 %v107, 126
    %v128 = vpop.permute.xlu0 %127
    %131 = vrot.lane.b32.xlu0 %v114, 125
    %v132 = vpop.permute.xlu0 %131
    %135 = vrot.lane.b32.xlu0 %v121, 124
    %v136 = vpop.permute.xlu0 %135
    %v138 = vld [vmem:[%s2] sm:$0xff]
    %v139 = vld [vmem:[%s2 + $0x8] sm:$0xff]
    %vm140 = vcmask 326656
    %v142 = vsel %vm140, %v138, 0
    %v145 = vsel %vm140, %v139, 0
    %147 = vmatpush.msra.mxu0 0.0
    %148 = vmatpush.msra.mxu0 0.0
    %149 = vmatpush.msra.mxu0 0.0
    %150 = vmatpush.msra.mxu0 0.0
    %151 = vmatpush.msra.mxu0 0.0
    %152 = vmatpush.msra.mxu0 0.0
    %153 = vmatpush.msra.mxu0 0.0
    %154 = vmatpush.msra.mxu0 0.0
    %155 = vmatpush.msra.mxu0 0.0
    %156 = vmatpush.msra.mxu0 0.0
    %157 = vmatpush.msra.mxu0 0.0
    %158 = vmatpush.msra.mxu0 %v136
    %159 = vmatpush.msra.mxu0 %v132
    %160 = vmatpush.msra.mxu0 %v128
    %161 = vmatpush.msra.mxu0 %v124
    %162 = vmatpush.msra.mxu0 %v93
    %163 = vmatmul.f32.gmra.mxu0 %v142
    %v164 = vpop.f32.mrf.mxu0
    %v165 = vadd.f32 0.0, %v164
    %166 = vmatmul.f32.gmra.mxu0 %v145
    %v167 = vpop.f32.mrf.mxu0
    %v168 = vadd.f32 0.0, %v167
    %169 = vdwg.mxu0
    %v170 = vld [vmem:[%s3] sm:$0xff]
    %v171 = vld [vmem:[%s3 + $0x8] sm:$0xff]
    %173 = vset.pattern.permute.xlu0 0
    %174 = vperm.xlu0 %173, %v170
    %v175 = vpop.permute.xlu0 %174
    %178 = vset.pattern.permute.xlu0 0
    %179 = vperm.xlu0 %178, %v171
    %v180 = vpop.permute.xlu0 %179
    %v182 = vmul.f32 %v165, %v175
    %v183 = vmul.f32 %v168, %v180
    %v184 = vld [vmem:[%s4] sm:$0xff]
    %v185 = vld [vmem:[%s4 + $0x8] sm:$0xff]
    %187 = vset.pattern.permute.xlu0 0
    %188 = vperm.xlu0 %187, %v184
    %v189 = vpop.permute.xlu0 %188
    %192 = vset.pattern.permute.xlu0 0
    %193 = vperm.xlu0 %192, %v185
    %v194 = vpop.permute.xlu0 %193
    %v196 = vadd.f32 %v182, %v189
    %v197 = vadd.f32 %v183, %v194
    %v198 = vmax.f32 %v196, 0.0
    %v199 = vmax.f32 %v197, 0.0
    %v200 = vld [vmem:[%s9] sm:$0x1]
    %v201 = vperm.slane %v200, 0
    %v202 = vmul.f32 %v198, %v201
    %v203 = vmul.f32 %v199, %v201
    %v204 = vld [vmem:[%s9 + $0x1] sm:$0x1]
    %v205 = vperm.slane %v204, 0
    %207 = vrot.lane.b32.xlu0 %v205, 1
    %v208 = vpop.permute.xlu0 %207
    %v210 = vmul.f32 %v198, %v208
    %v211 = vmul.f32 %v199, %v208
    %v212 = vld [vmem:[%s9 + $0x2] sm:$0x1]
    %v213 = vperm.slane %v212, 0
    %215 = vrot.lane.b32.xlu0 %v213, 2
    %v216 = vpop.permute.xlu0 %215
    %v218 = vmul.f32 %v198, %v216
    %v219 = vmul.f32 %v199, %v216
    %v220 = vld [vmem:[%s9 + $0x3] sm:$0x1]
    %v221 = vperm.slane %v220, 0
    %223 = vrot.lane.b32.xlu0 %v221, 3
    %v224 = vpop.permute.xlu0 %223
    %v226 = vmul.f32 %v198, %v224
    %v227 = vmul.f32 %v199, %v224
    %v228 = vld [vmem:[%s9 + $0x4] sm:$0x1]
    %v229 = vperm.slane %v228, 0
    %231 = vrot.lane.b32.xlu0 %v229, 4
    %v232 = vpop.permute.xlu0 %231
    %v234 = vmul.f32 %v198, %v232
    %v235 = vmul.f32 %v199, %v232
    %238 = vrot.lane.b32.xlu0 %v210, 127
    %v239 = vpop.permute.xlu0 %238
    %240 = vrot.lane.b32.xlu0 %v211, 127
    %v241 = vpop.permute.xlu0 %240
    %246 = vrot.lane.b32.xlu0 %v218, 126
    %v247 = vpop.permute.xlu0 %246
    %248 = vrot.lane.b32.xlu0 %v219, 126
    %v249 = vpop.permute.xlu0 %248
    %254 = vrot.lane.b32.xlu0 %v226, 125
    %v255 = vpop.permute.xlu0 %254
    %256 = vrot.lane.b32.xlu0 %v227, 125
    %v257 = vpop.permute.xlu0 %256
    %262 = vrot.lane.b32.xlu0 %v234, 124
    %v263 = vpop.permute.xlu0 %262
    %264 = vrot.lane.b32.xlu0 %v235, 124
    %v265 = vpop.permute.xlu0 %264
    %v268 = vld [vmem:[%s6] sm:$0xff]
    %v269 = vld [vmem:[%s6 + $0x8] sm:$0xff]
    %vm270 = vcmask 654336
    %v272 = vsel %vm270, %v268, 0
    %v275 = vsel %vm270, %v269, 0
    %277 = vmatpush.msra.mxu0 0.0
    %278 = vmatpush.msra.mxu0 0.0
    %279 = vmatpush.msra.mxu0 0.0
    %280 = vmatpush.msra.mxu0 0.0
    %281 = vmatpush.msra.mxu0 0.0
    %282 = vmatpush.msra.mxu0 0.0
    %283 = vmatpush.msra.mxu0 %v265
    %284 = vmatpush.msra.mxu0 %v263
    %285 = vmatpush.msra.mxu0 %v257
    %286 = vmatpush.msra.mxu0 %v255
    %287 = vmatpush.msra.mxu0 %v249
    %288 = vmatpush.msra.mxu0 %v247
    %289 = vmatpush.msra.mxu0 %v241
    %290 = vmatpush.msra.mxu0 %v239
    %291 = vmatpush.msra.mxu0 %v203
    %292 = vmatpush.msra.mxu0 %v202
    %293 = vmatmul.f32.gmra.mxu0 %v272
    %v294 = vpop.f32.mrf.mxu0
    %v295 = vadd.f32 0.0, %v294
    %296 = vmatmul.f32.gmra.mxu0 %v275
    %v297 = vpop.f32.mrf.mxu0
    %v298 = vadd.f32 0.0, %v297
    %299 = vdwg.mxu0
    %v300 = vld [vmem:[%s7] sm:$0xff]
    %v301 = vld [vmem:[%s7 + $0x8] sm:$0xff]
    %303 = vset.pattern.permute.xlu0 0
    %304 = vperm.xlu0 %303, %v300
    %v305 = vpop.permute.xlu0 %304
    %308 = vset.pattern.permute.xlu0 0
    %309 = vperm.xlu0 %308, %v301
    %v310 = vpop.permute.xlu0 %309
    %v312 = vmul.f32 %v295, %v305
    %v313 = vmul.f32 %v298, %v310
    %v314 = vld [vmem:[%s8] sm:$0xff]
    %v315 = vld [vmem:[%s8 + $0x8] sm:$0xff]
    %317 = vset.pattern.permute.xlu0 0
    %318 = vperm.xlu0 %317, %v314
    %v319 = vpop.permute.xlu0 %318
    %322 = vset.pattern.permute.xlu0 0
    %323 = vperm.xlu0 %322, %v315
    %v324 = vpop.permute.xlu0 %323
    %v326 = vadd.f32 %v312, %v319
    %v327 = vadd.f32 %v313, %v324
    %v328 = vmax.f32 %v326, 0.0
    %v329 = vmax.f32 %v327, 0.0
    %v330 = vld [vmem:[%s13] sm:$0x1]
    %v331 = vperm.slane %v330, 0
    %v332 = vmul.f32 %v328, %v331
    %v333 = vmul.f32 %v329, %v331
    %v334 = vld [vmem:[%s13 + $0x1] sm:$0x1]
    %v335 = vperm.slane %v334, 0
    %337 = vrot.lane.b32.xlu0 %v335, 1
    %v338 = vpop.permute.xlu0 %337
    %v340 = vmul.f32 %v328, %v338
    %v341 = vmul.f32 %v329, %v338
    %v342 = vld [vmem:[%s13 + $0x2] sm:$0x1]
    %v343 = vperm.slane %v342, 0
    %345 = vrot.lane.b32.xlu0 %v343, 2
    %v346 = vpop.permute.xlu0 %345
    %v348 = vmul.f32 %v328, %v346
    %v349 = vmul.f32 %v329, %v346
    %352 = vrot.lane.b32.xlu0 %v340, 127
    %v353 = vpop.permute.xlu0 %352
    %354 = vrot.lane.b32.xlu0 %v341, 127
    %v355 = vpop.permute.xlu0 %354
    %360 = vrot.lane.b32.xlu0 %v348, 126
    %v361 = vpop.permute.xlu0 %360
    %362 = vrot.lane.b32.xlu0 %v349, 126
    %v363 = vpop.permute.xlu0 %362
    %v366 = vld [vmem:[%s10] sm:$0x1]
    %vm367 = vcmask 392192
    %v369 = vsel %vm367, %v366, 0
    %371 = vmatpush.msra.mxu0 0.0
    %372 = vmatpush.msra.mxu0 0.0
    %373 = vmatpush.msra.mxu0 0.0
    %374 = vmatpush.msra.mxu0 0.0
    %375 = vmatpush.msra.mxu0 0.0
    %376 = vmatpush.msra.mxu0 0.0
    %377 = vmatpush.msra.mxu0 0.0
    %378 = vmatpush.msra.mxu0 0.0
    %379 = vmatpush.msra.mxu0 0.0
    %380 = vmatpush.msra.mxu0 0.0
    %381 = vmatpush.msra.mxu0 %v363
    %382 = vmatpush.msra.mxu0 %v361
    %383 = vmatpush.msra.mxu0 %v355
    %384 = vmatpush.msra.mxu0 %v353
    %385 = vmatpush.msra.mxu0 %v333
    %386 = vmatpush.msra.mxu0 %v332
    %387 = vmatmul.f32.gmra.mxu0 %v369
    %v388 = vpop.f32.mrf.mxu0
    %v389 = vadd.f32 0.0, %v388
    %390 = vdwg.mxu0
    %v391 = vld [vmem:[#allocation2] sm:$0x1]
    %393 = vset.pattern.permute.xlu0 0
    %394 = vperm.xlu0 %393, %v391
    %v395 = vpop.permute.xlu0 %394
    %v397 = vperm.slane %v395, 0
    %v398 = vmul.f32 %v389, %v397
    %v399 = vld [vmem:[#allocation3] sm:$0x1]
    %401 = vset.pattern.permute.xlu0 0
    %402 = vperm.xlu0 %401, %v399
    %v403 = vpop.permute.xlu0 %402
    %v405 = vperm.slane %v403, 0
    %v406 = vadd.f32 %v398, %v405
    %v407 = vxor.u32 %v406, 2147483648
    %v408 = vmul.f32 %v407, 1.442695
    %v409 = vpow.pop %v408
    %v410 = vadd.f32 %v409, 1.0
    %v411 = vrcp.pop %v410
    %v412 = vmul.f32 %v410, %v411
    %v413 = vsub.f32 1.0, %v412
    %v414 = vmul.f32 %v411, %v413
    %v415 = vadd.f32 %v411, %v414
    %vm416 = vweird.f32 %v410
    %vm417 = vweird.f32 %v411
    %vm418 = vmor %vm416, %vm417
    %v419 = vsel %vm418, %v411, %v415
    %v420 = vand.u32 2147483647, %v410
    %vm421 = vcmp.eq.f32.partialorder %v420, 8.507059e+37
    %v422 = vand.u32 %v410, 2147483648
    %v423 = vor.u32 1.1754944e-38, %v422
    %v424 = vsel %vm421, %v423, %v419
    %v425 = vmul.f32 1.0, %v424
    %v426 = vld [vmem:[%s1] sm:$0xff]
    %v427 = vld [vmem:[%s17] sm:$0x1]
    %v428 = vperm.slane %v427, 0
    %v429 = vmul.f32 %v426, %v428
    %v430 = vld [vmem:[%s17 + $0x1] sm:$0x1]
    %v431 = vperm.slane %v430, 0
    %433 = vrot.lane.b32.xlu0 %v431, 1
    %v434 = vpop.permute.xlu0 %433
    %v436 = vmul.f32 %v426, %v434
    %v437 = vld [vmem:[%s17 + $0x2] sm:$0x1]
    %v438 = vperm.slane %v437, 0
    %440 = vrot.lane.b32.xlu0 %v438, 2
    %v441 = vpop.permute.xlu0 %440
    %v443 = vmul.f32 %v426, %v441
    %v444 = vld [vmem:[%s17 + $0x3] sm:$0x1]
    %v445 = vperm.slane %v444, 0
    %447 = vrot.lane.b32.xlu0 %v445, 3
    %v448 = vpop.permute.xlu0 %447
    %v450 = vmul.f32 %v426, %v448
    %v451 = vld [vmem:[%s17 + $0x4] sm:$0x1]
    %v452 = vperm.slane %v451, 0
    %454 = vrot.lane.b32.xlu0 %v452, 4
    %v455 = vpop.permute.xlu0 %454
    %v457 = vmul.f32 %v426, %v455
    %459 = vrot.lane.b32.xlu0 %v436, 127
    %v460 = vpop.permute.xlu0 %459
    %463 = vrot.lane.b32.xlu0 %v443, 126
    %v464 = vpop.permute.xlu0 %463
    %467 = vrot.lane.b32.xlu0 %v450, 125
    %v468 = vpop.permute.xlu0 %467
    %471 = vrot.lane.b32.xlu0 %v457, 124
    %v472 = vpop.permute.xlu0 %471
    %v474 = vld [vmem:[%s14] sm:$0xff]
    %v475 = vld [vmem:[%s14 + $0x8] sm:$0xff]
    %v477 = vsel %vm140, %v474, 0
    %v480 = vsel %vm140, %v475, 0
    %482 = vmatpush.msra.mxu0 0.0
    %483 = vmatpush.msra.mxu0 0.0
    %484 = vmatpush.msra.mxu0 0.0
    %485 = vmatpush.msra.mxu0 0.0
    %486 = vmatpush.msra.mxu0 0.0
    %487 = vmatpush.msra.mxu0 0.0
    %488 = vmatpush.msra.mxu0 0.0
    %489 = vmatpush.msra.mxu0 0.0
    %490 = vmatpush.msra.mxu0 0.0
    %491 = vmatpush.msra.mxu0 0.0
    %492 = vmatpush.msra.mxu0 0.0
    %493 = vmatpush.msra.mxu0 %v472
    %494 = vmatpush.msra.mxu0 %v468
    %495 = vmatpush.msra.mxu0 %v464
    %496 = vmatpush.msra.mxu0 %v460
    %497 = vmatpush.msra.mxu0 %v429
    %498 = vmatmul.f32.gmra.mxu0 %v477
    %v499 = vpop.f32.mrf.mxu0
    %v500 = vadd.f32 0.0, %v499
    %501 = vmatmul.f32.gmra.mxu0 %v480
    %v502 = vpop.f32.mrf.mxu0
    %v503 = vadd.f32 0.0, %v502
    %504 = vdwg.mxu0
    %v505 = vld [vmem:[%s15] sm:$0xff]
    %v506 = vld [vmem:[%s15 + $0x8] sm:$0xff]
    %508 = vset.pattern.permute.xlu0 0
    %509 = vperm.xlu0 %508, %v505
    %v510 = vpop.permute.xlu0 %509
    %513 = vset.pattern.permute.xlu0 0
    %514 = vperm.xlu0 %513, %v506
    %v515 = vpop.permute.xlu0 %514
    %v517 = vmul.f32 %v500, %v510
    %v518 = vmul.f32 %v503, %v515
    %v519 = vld [vmem:[%s16] sm:$0xff]
    %v520 = vld [vmem:[%s16 + $0x8] sm:$0xff]
    %522 = vset.pattern.permute.xlu0 0
    %523 = vperm.xlu0 %522, %v519
    %v524 = vpop.permute.xlu0 %523
    %527 = vset.pattern.permute.xlu0 0
    %528 = vperm.xlu0 %527, %v520
    %v529 = vpop.permute.xlu0 %528
    %v531 = vadd.f32 %v517, %v524
    %v532 = vadd.f32 %v518, %v529
    %v533 = vmax.f32 %v531, 0.0
    %v534 = vmax.f32 %v532, 0.0
    %v535 = vld [vmem:[%s21] sm:$0x1]
    %v536 = vperm.slane %v535, 0
    %v537 = vmul.f32 %v533, %v536
    %v538 = vmul.f32 %v534, %v536
    %v539 = vld [vmem:[%s21 + $0x1] sm:$0x1]
    %v540 = vperm.slane %v539, 0
    %542 = vrot.lane.b32.xlu0 %v540, 1
    %v543 = vpop.permute.xlu0 %542
    %v545 = vmul.f32 %v533, %v543
    %v546 = vmul.f32 %v534, %v543
    %v547 = vld [vmem:[%s21 + $0x2] sm:$0x1]
    %v548 = vperm.slane %v547, 0
    %550 = vrot.lane.b32.xlu0 %v548, 2
    %v551 = vpop.permute.xlu0 %550
    %v553 = vmul.f32 %v533, %v551
    %v554 = vmul.f32 %v534, %v551
    %v555 = vld [vmem:[%s21 + $0x3] sm:$0x1]
    %v556 = vperm.slane %v555, 0
    %558 = vrot.lane.b32.xlu0 %v556, 3
    %v559 = vpop.permute.xlu0 %558
    %v561 = vmul.f32 %v533, %v559
    %v562 = vmul.f32 %v534, %v559
    %v563 = vld [vmem:[%s21 + $0x4] sm:$0x1]
    %v564 = vperm.slane %v563, 0
    %566 = vrot.lane.b32.xlu0 %v564, 4
    %v567 = vpop.permute.xlu0 %566
    %v569 = vmul.f32 %v533, %v567
    %v570 = vmul.f32 %v534, %v567
    %573 = vrot.lane.b32.xlu0 %v545, 127
    %v574 = vpop.permute.xlu0 %573
    %575 = vrot.lane.b32.xlu0 %v546, 127
    %v576 = vpop.permute.xlu0 %575
    %581 = vrot.lane.b32.xlu0 %v553, 126
    %v582 = vpop.permute.xlu0 %581
    %583 = vrot.lane.b32.xlu0 %v554, 126
    %v584 = vpop.permute.xlu0 %583
    %589 = vrot.lane.b32.xlu0 %v561, 125
    %v590 = vpop.permute.xlu0 %589
    %591 = vrot.lane.b32.xlu0 %v562, 125
    %v592 = vpop.permute.xlu0 %591
    %597 = vrot.lane.b32.xlu0 %v569, 124
    %v598 = vpop.permute.xlu0 %597
    %599 = vrot.lane.b32.xlu0 %v570, 124
    %v600 = vpop.permute.xlu0 %599
    %v603 = vld [vmem:[%s18] sm:$0xff]
    %v604 = vld [vmem:[%s18 + $0x8] sm:$0xff]
    %v606 = vsel %vm270, %v603, 0
    %v609 = vsel %vm270, %v604, 0
    %611 = vmatpush.msra.mxu0 0.0
    %612 = vmatpush.msra.mxu0 0.0
    %613 = vmatpush.msra.mxu0 0.0
    %614 = vmatpush.msra.mxu0 0.0
    %615 = vmatpush.msra.mxu0 0.0
    %616 = vmatpush.msra.mxu0 0.0
    %617 = vmatpush.msra.mxu0 %v600
    %618 = vmatpush.msra.mxu0 %v598
    %619 = vmatpush.msra.mxu0 %v592
    %620 = vmatpush.msra.mxu0 %v590
    %621 = vmatpush.msra.mxu0 %v584
    %622 = vmatpush.msra.mxu0 %v582
    %623 = vmatpush.msra.mxu0 %v576
    %624 = vmatpush.msra.mxu0 %v574
    %625 = vmatpush.msra.mxu0 %v538
    %626 = vmatpush.msra.mxu0 %v537
    %627 = vmatmul.f32.gmra.mxu0 %v606
    %v628 = vpop.f32.mrf.mxu0
    %v629 = vadd.f32 0.0, %v628
    %630 = vmatmul.f32.gmra.mxu0 %v609
    %v631 = vpop.f32.mrf.mxu0
    %v632 = vadd.f32 0.0, %v631
    %633 = vdwg.mxu0
    %v634 = vld [vmem:[%s19] sm:$0xff]
    %v635 = vld [vmem:[%s19 + $0x8] sm:$0xff]
    %637 = vset.pattern.permute.xlu0 0
    %638 = vperm.xlu0 %637, %v634
    %v639 = vpop.permute.xlu0 %638
    %642 = vset.pattern.permute.xlu0 0
    %643 = vperm.xlu0 %642, %v635
    %v644 = vpop.permute.xlu0 %643
    %v646 = vmul.f32 %v629, %v639
    %v647 = vmul.f32 %v632, %v644
    %v648 = vld [vmem:[%s20] sm:$0xff]
    %v649 = vld [vmem:[%s20 + $0x8] sm:$0xff]
    %651 = vset.pattern.permute.xlu0 0
    %652 = vperm.xlu0 %651, %v648
    %v653 = vpop.permute.xlu0 %652
    %656 = vset.pattern.permute.xlu0 0
    %657 = vperm.xlu0 %656, %v649
    %v658 = vpop.permute.xlu0 %657
    %v660 = vadd.f32 %v646, %v653
    %v661 = vadd.f32 %v647, %v658
    %v662 = vmax.f32 %v660, 0.0
    %v663 = vmax.f32 %v661, 0.0
    %v664 = vld [vmem:[%s22] sm:$0x1]
    %vm665 = vcmask 130048
    %v667 = vsel %vm665, %v664, 0
    %669 = vmatpush.msra.mxu0 0.0
    %670 = vmatpush.msra.mxu0 0.0
    %671 = vmatpush.msra.mxu0 0.0
    %672 = vmatpush.msra.mxu0 0.0
    %673 = vmatpush.msra.mxu0 0.0
    %674 = vmatpush.msra.mxu0 0.0
    %675 = vmatpush.msra.mxu0 0.0
    %676 = vmatpush.msra.mxu0 0.0
    %677 = vmatpush.msra.mxu0 0.0
    %678 = vmatpush.msra.mxu0 0.0
    %679 = vmatpush.msra.mxu0 0.0
    %680 = vmatpush.msra.mxu0 0.0
    %681 = vmatpush.msra.mxu0 0.0
    %682 = vmatpush.msra.mxu0 0.0
    %683 = vmatpush.msra.mxu0 %v663
    %684 = vmatpush.msra.mxu0 %v662
    %685 = vmatmul.f32.gmra.mxu0 %v667
    %v686 = vpop.f32.mrf.mxu0
    %v687 = vadd.f32 0.0, %v686
    %688 = vdwg.mxu0
    %v689 = vld [vmem:[%s24] sm:$0xff]
    %v690 = vld [vmem:[%s24 + $0x8] sm:$0x3f]
    %v691 = vld [vmem:[#allocation4] sm:$0x1]
    %693 = vset.pattern.permute.xlu0 0
    %694 = vperm.xlu0 %693, %v691
    %v695 = vpop.permute.xlu0 %694
    %v697 = vperm.slane %v695, 0
    %vm698 = vcmask 113664
    %v700 = vsel %vm698, %v687, 0
    %vm702 = vcmask 1045504
    %v704 = vsel %vm702, %v690, 0
    %706 = vmatpush.msra.mxu0 0.0
    %707 = vmatpush.msra.mxu0 0.0
    %708 = vmatpush.msra.mxu0 0.0
    %709 = vmatpush.msra.mxu0 0.0
    %710 = vmatpush.msra.mxu0 0.0
    %711 = vmatpush.msra.mxu0 0.0
    %712 = vmatpush.msra.mxu0 0.0
    %713 = vmatpush.msra.mxu0 0.0
    %714 = vmatpush.msra.mxu0 0.0
    %715 = vmatpush.msra.mxu0 0.0
    %716 = vmatpush.msra.mxu0 0.0
    %717 = vmatpush.msra.mxu0 0.0
    %718 = vmatpush.msra.mxu0 0.0
    %719 = vmatpush.msra.mxu0 0.0
    %720 = vmatpush.msra.mxu0 %v704
    %721 = vmatpush.msra.mxu0 %v689
    %722 = vmatmul.f32.gmra.mxu0 %v700
    %v723 = vpop.f32.mrf.mxu0
    %v724 = vadd.f32 %v697, %v723
    %725 = vdwg.mxu0
    %v726 = vxor.u32 %v724, 2147483648
    %v727 = vmul.f32 %v726, 1.442695
    %v728 = vpow.pop %v727
    %v729 = vadd.f32 %v728, 1.0
    %v730 = vrcp.pop %v729
    %v731 = vmul.f32 %v729, %v730
    %v732 = vsub.f32 1.0, %v731
    %v733 = vmul.f32 %v730, %v732
    %v734 = vadd.f32 %v730, %v733
    %vm735 = vweird.f32 %v729
    %vm736 = vweird.f32 %v730
    %vm737 = vmor %vm735, %vm736
    %v738 = vsel %vm737, %v730, %v734
    %v739 = vand.u32 2147483647, %v729
    %vm740 = vcmp.eq.f32.partialorder %v739, 8.507059e+37
    %v741 = vand.u32 %v729, 2147483648
    %v742 = vor.u32 1.1754944e-38, %v741
    %v743 = vsel %vm740, %v742, %v738
    %v744 = vmul.f32 1.0, %v743
    %v745 = vmul.f32 %v425, 5.0
    %v746 = vmul.f32 %v745, %v744
    %v747 = vld [vmem:[%s25] sm:$0x1]
    %v748 = vmul.f32 %v746, %v747
    %vm749 = vcmask 385024
    %750 = vst.msk [vmem:[#allocation5] sm:$0x1] %vm749, %v748
    // Predicated region
    $region106: #{tpu_custom_call.1} parent=1 // pred_check
      _
    $region107: #{tpu_custom_call.1} parent=1 // pred_check_branch
      %752 = sbr.rel (0) target = $region109
    $region108: #{tpu_custom_call.1} parent=1 // pred_region
      %754 = vsyncadd [#allocation6], 0
      %s756 = sshll.u32 [#allocation5], 4
      %s757 = int_to_ptr.vmem [resolvable:$true] %s756
      %s758 = sshll.u32 %s26, 4
      %s759 = int_to_ptr.hbm [resolvable:$true] %s758
      %761 = dma.vmem_to_hbm [thread:$0]  %s757, 16, %s759, [#allocation6]
    $region109: #{tpu_custom_call.1} parent=1 // pred_fallthru
      _
    // Predicated region
    $region110: #{tpu_custom_call.1} parent=1 // pred_check
      _
    $region111: #{tpu_custom_call.1} parent=1 // pred_check_branch
      %763 = sbr.rel (0) target = $region113
    $region112: #{tpu_custom_call.1} parent=1 // pred_region
      %765 = dma.done [#allocation6], 16
    $region113: #{tpu_custom_call.1} parent=1 // pred_fallthru
      _
    %766 = vsyncpa [#allocation6], 1

</llo_original>
